<compile_context>
chip_gen: v7x
topology: tpu7x:2x2x1
jax: 0.10.0
libtpu: 0.0.40
codegen_flags: <defaults>
</compile_context>

<pallas_src>
import jax
import jax.numpy as jnp
from jax.experimental import pallas as pl
from jax.experimental.pallas import tpu as pltpu


# -----------------------------------------------------------------------------
# Single-step cell kernel (matches the module's forward exactly).
# -----------------------------------------------------------------------------
def lstm_cell_kernel(x_ref, h_ref, c_ref, w_ref, b_ref, h_out_ref, c_out_ref):
    S = c_ref.shape[-1]

    # One fused MXU matmul over K = input_size + state_size; bf16 operands,
    # f32 accumulation.
    xh = jnp.concatenate([x_ref[...], h_ref[...]], axis=-1)
    gates = jnp.dot(xh.astype(w_ref.dtype), w_ref[...],
                    preferred_element_type=jnp.float32)
    gates = gates + b_ref[...]                       # (B, 4S) + (1, 4S)

    # Gate order [i, f, o, g] as in the source module.
    ifo = jax.nn.sigmoid(gates[:, :3 * S])
    i = ifo[:, 0 * S:1 * S]
    f = ifo[:, 1 * S:2 * S]
    o = ifo[:, 2 * S:3 * S]
    g = jnp.tanh(gates[:, 3 * S:4 * S])

    c_new = f * c_ref[...] + i * g
    h_new = o * jnp.tanh(c_new)

    h_out_ref[...] = h_new.astype(h_out_ref.dtype)
    c_out_ref[...] = c_new.astype(c_out_ref.dtype)


def fuse_lstm_weights(wx_t, wh_t, weight_dtype=jnp.bfloat16):
    """Concatenate [Wx^T; Wh^T] once -> (I + S, 4S), stored in weight_dtype."""
    return jnp.concatenate([wx_t, wh_t], axis=0).astype(weight_dtype)


def lstm_cell(x, hidden_state, cell_state, w_fused, bias):
    """One LSTM cell step (the module's forward).

    x: (B, I) f32; hidden/cell state: (B, S) f32 or None (-> zeros);
    w_fused: (I + S, 4S) bf16; bias: (1, 4S) f32.
    Returns (h_new, c_new), each (B, S) f32.
    """
    B, I = x.shape
    S = w_fused.shape[-1] // 4
    assert S % 128 == 0, "state_size must be a multiple of 128 (lane tiles)"
    if hidden_state is None:
        hidden_state = jnp.zeros((B, S), x.dtype)
    if cell_state is None:
        cell_state = jnp.zeros((B, S), x.dtype)

    vmem = pl.BlockSpec(memory_space=pltpu.MemorySpace.VMEM)
    flops = 2 * B * (I + S) * (4 * S)
    transcendentals = 5 * B * S
    bytes_accessed = int(
        w_fused.size * w_fused.dtype.itemsize
        + (x.size + hidden_state.size + cell_state.size + bias.size) * 4
        + 2 * B * S * 4)

    h_new, c_new = pl.pallas_call(
        lstm_cell_kernel,
        out_shape=(jax.ShapeDtypeStruct((B, S), x.dtype),
                   jax.ShapeDtypeStruct((B, S), x.dtype)),
        in_specs=[vmem] * 5,
        out_specs=(vmem, vmem),
        cost_estimate=pl.CostEstimate(flops=flops,
                                      transcendentals=transcendentals,
                                      bytes_accessed=bytes_accessed),
    )(x, hidden_state, cell_state, w_fused, bias)
    return h_new, c_new


# -----------------------------------------------------------------------------
# Hoisted input projection: X_proj = X @ Wx^T + b for all timesteps at once.
# -----------------------------------------------------------------------------
def proj_kernel(x_ref, w_ref, b_ref, out_ref):
    out_ref[...] = (jnp.dot(x_ref[...].astype(w_ref.dtype), w_ref[...],
                            preferred_element_type=jnp.float32)
                    + b_ref[...])


def input_projection(x2d, wx, bias):
    """x2d: (M, I) f32, wx: (I, 4S) bf16, bias: (1, 4S) f32 -> (M, 4S) f32."""
    M, I = x2d.shape
    N = wx.shape[-1]
    vmem = pl.BlockSpec(memory_space=pltpu.MemorySpace.VMEM)
    # TODO(synk): tile M / N with a grid for shapes that exceed scoped VMEM.
    return pl.pallas_call(
        proj_kernel,
        out_shape=jax.ShapeDtypeStruct((M, N), jnp.float32),
        in_specs=[vmem] * 3,
        out_specs=vmem,
        cost_estimate=pl.CostEstimate(
            flops=2 * M * I * N, transcendentals=0,
            bytes_accessed=int(x2d.size * 4 + wx.size * wx.dtype.itemsize
                               + bias.size * 4 + M * N * 4)),
    )(x2d, wx, bias)


# -----------------------------------------------------------------------------
# Sequence kernel: T cell steps in one pallas_call (grid=(T,), "arbitrary").
# -----------------------------------------------------------------------------
def lstm_seq_kernel(xp_ref, wh_ref, h0_ref, c0_ref, h_seq_ref, c_out_ref,
                    h_scr, c_scr):
    t = pl.program_id(0)
    S = c_scr.shape[-1]

    @pl.when(t == 0)
    def _init():
        h_scr[...] = h0_ref[...].astype(h_scr.dtype)
        c_scr[...] = c0_ref[...]

    # x-projection (already includes bias, f32) + recurrent matmul (bf16 MXU,
    # f32 accumulate) with the VMEM-resident Wh.
    gates = xp_ref[0] + jnp.dot(h_scr[...], wh_ref[...],
                                preferred_element_type=jnp.float32)

    ifo = jax.nn.sigmoid(gates[:, :3 * S])
    i = ifo[:, 0 * S:1 * S]
    f = ifo[:, 1 * S:2 * S]
    o = ifo[:, 2 * S:3 * S]
    g = jnp.tanh(gates[:, 3 * S:4 * S])

    c_new = f * c_scr[...] + i * g
    h_new = o * jnp.tanh(c_new)

    c_scr[...] = c_new
    h_scr[...] = h_new.astype(h_scr.dtype)          # bf16 carried state
    h_seq_ref[0] = h_new.astype(h_seq_ref.dtype)

    @pl.when(t == pl.num_programs(0) - 1)
    def _finalize():
        c_out_ref[...] = c_new.astype(c_out_ref.dtype)


def lstm_sequence(x_seq, hidden_state, cell_state, wx_t, wh_t, bias,
                  weight_dtype=jnp.bfloat16):
    """Apply the LSTM cell over a sequence.

    x_seq: (T, B, I) f32; hidden/cell state: (B, S) f32 or None;
    wx_t: (I, 4S) f32 (== matrices.weight.T), wh_t: (S, 4S) f32
    (== h_matrices.weight.T), bias: (1, 4S) f32.
    Returns (h_seq (T, B, S) f32, c_final (B, S) f32).
    """
    T, B, I = x_seq.shape
    S = wh_t.shape[0]
    assert wx_t.shape == (I, 4 * S) and wh_t.shape == (S, 4 * S)
    assert S % 128 == 0, "state_size must be a multiple of 128 (lane tiles)"
    if hidden_state is None:
        hidden_state = jnp.zeros((B, S), jnp.float32)
    if cell_state is None:
        cell_state = jnp.zeros((B, S), jnp.float32)

    # Hoist the non-recurrent projection: one big matmul for all T steps.
    wx = wx_t.astype(weight_dtype)
    wh = wh_t.astype(weight_dtype)
    x_proj = input_projection(x_seq.reshape(T * B, I), wx, bias)
    x_proj = x_proj.reshape(T, B, 4 * S)

    grid_spec = pltpu.PrefetchScalarGridSpec(
        num_scalar_prefetch=0,
        grid=(T,),
        in_specs=[
            # Streamed per-step x-projection (double-buffered by Pallas).
            pl.BlockSpec((1, B, 4 * S), lambda t: (t, 0, 0)),
            # Recurrent weight: constant index_map -> DMA'd once, VMEM-resident.
            pl.BlockSpec((S, 4 * S), lambda t: (0, 0)),
            pl.BlockSpec((B, S), lambda t: (0, 0)),   # h0
            pl.BlockSpec((B, S), lambda t: (0, 0)),   # c0
        ],
        out_specs=[
            pl.BlockSpec((1, B, S), lambda t: (t, 0, 0)),  # h per step
            pl.BlockSpec((B, S), lambda t: (0, 0)),        # final c
        ],
        scratch_shapes=[
            pltpu.VMEM((B, S), jnp.bfloat16),   # carried h (MXU-ready)
            pltpu.VMEM((B, S), jnp.float32),    # carried c (full precision)
        ],
    )

    flops = 2 * T * B * S * (4 * S)
    transcendentals = 5 * T * B * S
    bytes_accessed = int(
        x_proj.size * 4 + wh.size * wh.dtype.itemsize
        + (hidden_state.size + cell_state.size) * 4
        + (T * B * S + B * S) * 4)

    h_seq, c_final = pl.pallas_call(
        lstm_seq_kernel,
        out_shape=(jax.ShapeDtypeStruct((T, B, S), jnp.float32),
                   jax.ShapeDtypeStruct((B, S), jnp.float32)),
        grid_spec=grid_spec,
        compiler_params=pltpu.CompilerParams(
            dimension_semantics=("arbitrary",)),
        cost_estimate=pl.CostEstimate(flops=flops,
                                      transcendentals=transcendentals,
                                      bytes_accessed=bytes_accessed),
    )(x_proj, wh, hidden_state, cell_state)
    return h_seq, c_final


# -----------------------------------------------------------------------------
# Pure-JAX references mirroring the PyTorch forward.
# -----------------------------------------------------------------------------
def lstm_cell_ref(x, h, c, wx_t, wh_t, bias, matmul_dtype=jnp.float32):
    S = h.shape[-1]
    xh = jnp.concatenate([x, h], axis=-1).astype(matmul_dtype)
    w = jnp.concatenate([wx_t, wh_t], axis=0).astype(matmul_dtype)
    gates = jnp.dot(xh, w, preferred_element_type=jnp.float32) + bias
    i = jax.nn.sigmoid(gates[:, :S])
    f = jax.nn.sigmoid(gates[:, S:2 * S])
    o = jax.nn.sigmoid(gates[:, 2 * S:3 * S])
    g = jnp.tanh(gates[:, 3 * S:])
    c_new = f * c + i * g
    h_new = o * jnp.tanh(c_new)
    return h_new, c_new


def lstm_sequence_ref(x_seq, h, c, wx_t, wh_t, bias, matmul_dtype=jnp.float32):
    hs = []
    for t in range(x_seq.shape[0]):
        h, c = lstm_cell_ref(x_seq[t], h, c, wx_t, wh_t, bias, matmul_dtype)
        hs.append(h)
    return jnp.stack(hs), c


if __name__ == "__main__":
    batch = 8
    input_size = 128
    state_size = 128
    seq_len = 16

    key = jax.random.PRNGKey(0)
    kx, kseq, kwx, kwh, kb = jax.random.split(key, 5)

    # nn.Linear-shaped parameters, stored transposed; gate order [i, f, o, g].
    bound_x = 1.0 / (input_size ** 0.5)
    bound_h = 1.0 / (state_size ** 0.5)
    wx_t = jax.random.uniform(kwx, (input_size, 4 * state_size),
                              jnp.float32, -bound_x, bound_x)
    wh_t = jax.random.uniform(kwh, (state_size, 4 * state_size),
                              jnp.float32, -bound_h, bound_h)
    bias = jax.random.uniform(kb, (1, 4 * state_size),
                              jnp.float32, -bound_x, bound_x)

    # ---------------- single-step (the module's literal forward) -------------
    w_fused = fuse_lstm_weights(wx_t, wh_t, jnp.bfloat16)
    x = jax.random.normal(kx, (batch, input_size), jnp.float32)

    h1, c1 = lstm_cell(x, None, None, w_fused, bias)
    jax.block_until_ready((h1, c1))

    h0 = jnp.zeros((batch, state_size), jnp.float32)
    c0 = jnp.zeros((batch, state_size), jnp.float32)
    h_ref_bf, c_ref_bf = lstm_cell_ref(x, h0, c0, wx_t, wh_t, bias,
                                       matmul_dtype=jnp.bfloat16)
    h_ref_f32, c_ref_f32 = lstm_cell_ref(x, h0, c0, wx_t, wh_t, bias,
                                         matmul_dtype=jnp.float32)
    assert jnp.allclose(h1, h_ref_bf, atol=2e-3, rtol=2e-3)
    assert jnp.allclose(c1, c_ref_bf, atol=2e-3, rtol=2e-3)
    assert jnp.allclose(h1, h_ref_f32, atol=5e-2, rtol=5e-2)
    assert jnp.allclose(c1, c_ref_f32, atol=5e-2, rtol=5e-2)

    # second step with non-zero states (general path)
    h2, c2 = lstm_cell(x, h1, c1, w_fused, bias)
    jax.block_until_ready((h2, c2))

    # ---------------- fused sequence kernel (T steps in one call) ------------
    x_seq = jax.random.normal(kseq, (seq_len, batch, input_size), jnp.float32)

    h_seq, c_final = lstm_sequence(x_seq, None, None, wx_t, wh_t, bias)
    jax.block_until_ready((h_seq, c_final))

    hs_ref_bf, c_ref_seq_bf = lstm_sequence_ref(x_seq, h0, c0, wx_t, wh_t,
                                                bias, matmul_dtype=jnp.bfloat16)
    hs_ref_f32, c_ref_seq_f32 = lstm_sequence_ref(x_seq, h0, c0, wx_t, wh_t,
                                                  bias,
                                                  matmul_dtype=jnp.float32)
    assert jnp.allclose(h_seq, hs_ref_bf, atol=5e-3, rtol=5e-3)
    assert jnp.allclose(c_final, c_ref_seq_bf, atol=5e-3, rtol=5e-3)
    assert jnp.allclose(h_seq, hs_ref_f32, atol=5e-2, rtol=5e-2)
    assert jnp.allclose(c_final, c_ref_seq_f32, atol=5e-2, rtol=5e-2)

    print("KERNEL_OK")
</pallas_src>

<mosaic_0001>
module attributes {stable_mosaic.version = 11 : i64} {
  func.func @lstm_cell_kernel(%arg0: memref<8x128xf32, #tpu.memory_space<vmem>>, %arg1: memref<8x128xf32, #tpu.memory_space<vmem>>, %arg2: memref<8x128xf32, #tpu.memory_space<vmem>>, %arg3: memref<256x512xbf16, #tpu.memory_space<vmem>>, %arg4: memref<1x512xf32, #tpu.memory_space<vmem>>, %arg5: memref<8x128xf32, #tpu.memory_space<vmem>>, %arg6: memref<8x128xf32, #tpu.memory_space<vmem>>) attributes {dimension_semantics = [], scalar_prefetch = 0 : i64, scratch_operands = 0 : i64, tpu.core_type = #tpu.core_type<tc>} {
    %c0 = arith.constant 0 : index
    %c0_0 = arith.constant 0 : index
    %0 = vector.load %arg0[%c0, %c0_0] : memref<8x128xf32, #tpu.memory_space<vmem>>, vector<8x128xf32>
    %c0_1 = arith.constant 0 : index
    %c0_2 = arith.constant 0 : index
    %1 = vector.load %arg1[%c0_1, %c0_2] : memref<8x128xf32, #tpu.memory_space<vmem>>, vector<8x128xf32>
    %2 = tpu.concatenate %0, %1 in 1 : vector<8x128xf32>, vector<8x128xf32> -> vector<8x256xf32>
    %3 = arith.truncf %2 : vector<8x256xf32> to vector<8x256xbf16>
    %c0_3 = arith.constant 0 : index
    %c0_4 = arith.constant 0 : index
    %4 = vector.load %arg3[%c0_3, %c0_4] : memref<256x512xbf16, #tpu.memory_space<vmem>>, vector<256x512xbf16>
    %cst = arith.constant dense<0.000000e+00> : vector<8x512xf32>
    %5 = tpu.matmul %3, %4, %cst {dimension_numbers = #tpu.dot_dimension_numbers<[1], [0], [0], [1], [0, 0, 1, 1], [], []>} : vector<8x256xbf16>, vector<256x512xbf16>, vector<8x512xf32> -> vector<8x512xf32>
    %c0_5 = arith.constant 0 : index
    %c0_6 = arith.constant 0 : index
    %6 = vector.load %arg4[%c0_5, %c0_6] : memref<1x512xf32, #tpu.memory_space<vmem>>, vector<1x512xf32>
    %7 = vector.broadcast %6 : vector<1x512xf32> to vector<8x512xf32>
    %8 = arith.addf %5, %7 : vector<8x512xf32>
    %9 = vector.extract_strided_slice %8 {offsets = [0, 0], sizes = [8, 384], strides = [1, 1]} : vector<8x512xf32> to vector<8x384xf32>
    %10 = arith.negf %9 : vector<8x384xf32>
    %11 = math.exp %10 : vector<8x384xf32>
    %cst_7 = arith.constant 1.000000e+00 : f32
    %12 = vector.broadcast %cst_7 : f32 to vector<8x384xf32>
    %13 = arith.addf %12, %11 : vector<8x384xf32>
    %14 = arith.divf %12, %13 : vector<8x384xf32>
    %15 = vector.extract_strided_slice %14 {offsets = [0, 0], sizes = [8, 128], strides = [1, 1]} : vector<8x384xf32> to vector<8x128xf32>
    %16 = vector.extract_strided_slice %14 {offsets = [0, 128], sizes = [8, 128], strides = [1, 1]} : vector<8x384xf32> to vector<8x128xf32>
    %17 = vector.extract_strided_slice %14 {offsets = [0, 256], sizes = [8, 128], strides = [1, 1]} : vector<8x384xf32> to vector<8x128xf32>
    %18 = vector.extract_strided_slice %8 {offsets = [0, 384], sizes = [8, 128], strides = [1, 1]} : vector<8x512xf32> to vector<8x128xf32>
    %19 = math.tanh %18 : vector<8x128xf32>
    %c0_8 = arith.constant 0 : index
    %c0_9 = arith.constant 0 : index
    %20 = vector.load %arg2[%c0_8, %c0_9] : memref<8x128xf32, #tpu.memory_space<vmem>>, vector<8x128xf32>
    %21 = arith.mulf %16, %20 : vector<8x128xf32>
    %22 = arith.mulf %15, %19 : vector<8x128xf32>
    %23 = arith.addf %21, %22 : vector<8x128xf32>
    %24 = math.tanh %23 : vector<8x128xf32>
    %25 = arith.mulf %17, %24 : vector<8x128xf32>
    %c0_10 = arith.constant 0 : index
    %c0_11 = arith.constant 0 : index
    %26 = vector.load %arg5[%c0_10, %c0_11] : memref<8x128xf32, #tpu.memory_space<vmem>>, vector<8x128xf32>
    tpu.vector_store %arg5[%c0_10, %c0_11], %25 {strides = array<i32>} : memref<8x128xf32, #tpu.memory_space<vmem>>, vector<8x128xf32>,
    %c0_12 = arith.constant 0 : index
    %c0_13 = arith.constant 0 : index
    %27 = vector.load %arg6[%c0_12, %c0_13] : memref<8x128xf32, #tpu.memory_space<vmem>>, vector<8x128xf32>
    tpu.vector_store %arg6[%c0_12, %c0_13], %23 {strides = array<i32>} : memref<8x128xf32, #tpu.memory_space<vmem>>, vector<8x128xf32>,
    return
  }
}

</mosaic_0001>

<llo_original>
// kernel: tpu_custom_call.1
$region0: #{tpu_custom_call.1}
  #allocation0 [shape = 'u32[]', space=smem, size = 0x4, offset = 0x4, fixed_abs, tag = 'smem constant byte address 0x4 - core index']
  #allocation1 [shape = 'u32[144,128]{1,0:T(1,128)}', space=vmem, size = 0x12000, scoped, tag = 'internal scratch']
  %s0 = inlined_call_operand.hbm [shape: f32[8,128], index: 0, kind: input, shape index: {}]
  %s1 = inlined_call_operand.hbm [shape: f32[8,128], index: 1, kind: input, shape index: {}]
  %s2 = inlined_call_operand.hbm [shape: f32[8,128], index: 2, kind: input, shape index: {}]
  %s3 = inlined_call_operand.hbm [shape: bf16[256,512], index: 3, kind: input, shape index: {}]
  %s4 = inlined_call_operand.vmem [shape: f32[1,512], index: 4, kind: input, shape index: {}]
  %s5 = inlined_call_operand.hbm [shape: f32[8,128], index: 5, kind: output, shape index: {0}]
  %s6 = inlined_call_operand.hbm [shape: f32[8,128], index: 6, kind: output, shape index: {1}]
  %7 = xla_tuple %s5, %s6
  %s8 = sld [smem:[#allocation0]]
  $region54: #{tpu_custom_call.1} parent=0
    _
  %s10 = ssub.s32 1, %s8
  %s11 = scalar_select 0, %s10, %s8
  $region1: #{tpu_custom_call.1} parent=0
    #allocation2 [shape = 'u8[4096]{0}', space=vmem, size = 0x1000, scoped, tag = 'input window, operand 0, single buffered']
    #allocation3 [shape = 's32[1]{0}', space=sflag, size = 0x4, scoped, tag = 'scoped memory for tpu_custom_call.1']
    #allocation4 [shape = 's32[1]{0}', space=sflag, size = 0x4, scoped, tag = 'scoped memory for tpu_custom_call.1']
    #allocation5 [shape = 'u8[4096]{0}', space=vmem, size = 0x1000, scoped, tag = 'input window, operand 1, single buffered']
    #allocation6 [shape = 's32[1]{0}', space=sflag, size = 0x4, scoped, tag = 'scoped memory for tpu_custom_call.1']
    #allocation7 [shape = 'u8[4096]{0}', space=vmem, size = 0x1000, scoped, tag = 'input window, operand 2, single buffered']
    #allocation8 [shape = 'u8[262144]{0}', space=vmem, size = 0x40000, scoped, tag = 'input window, operand 3, single buffered']
    #allocation9 [shape = 's32[1]{0}', space=sflag, size = 0x4, scoped, tag = 'scoped memory for tpu_custom_call.1']
    #allocation10 [shape = 'u8[4096]{0}', space=vmem, size = 0x1000, scoped, tag = 'output window, operand 0, single buffered']
    #allocation11 [shape = 'u8[4096]{0}', space=vmem, size = 0x1000, scoped, tag = 'output window, operand 1, single buffered']
    #allocation12 [shape = 's32[1]{0}', space=sflag, size = 0x4, scoped, tag = 'scoped memory for tpu_custom_call.1']
    %12 = vsyncpa [#allocation3], 0
    %13 = vsyncpa [#allocation6], 0
    %14 = vsyncpa [#allocation9], 0
    %15 = vsyncpa [#allocation4], 0
    %16 = vsyncpa [#allocation12], 0
    // Predicated region
    $region2: #{tpu_custom_call.1} parent=1 // pred_check
      _
    $region3: #{tpu_custom_call.1} parent=1 // pred_check_branch
      %18 = sbr.rel (0) target = $region5
    $region4: #{tpu_custom_call.1} parent=1 // pred_region
      %s20 = ssub.s32 128, 128
      %21 = vsyncadd [#allocation3], %s20
      %s23 = sshll.u32 [#allocation2], 4
      %s24 = int_to_ptr.vmem [resolvable:$true] %s23
      %26 = dma.hbm_to_vmem [thread:$0]  %s0, 128, %s24, [#allocation3]
    $region5: #{tpu_custom_call.1} parent=1 // pred_fallthru
      _
    // Predicated region
    $region6: #{tpu_custom_call.1} parent=1 // pred_check
      _
    $region7: #{tpu_custom_call.1} parent=1 // pred_check_branch
      %28 = sbr.rel (0) target = $region9
    $region8: #{tpu_custom_call.1} parent=1 // pred_region
      %s30 = ssub.s32 128, 128
      %31 = vsyncadd [#allocation6], %s30
      %s33 = sshll.u32 [#allocation5], 4
      %s34 = int_to_ptr.vmem [resolvable:$true] %s33
      %36 = dma.hbm_to_vmem [thread:$0]  %s1, 128, %s34, [#allocation6]
    $region9: #{tpu_custom_call.1} parent=1 // pred_fallthru
      _
    // Predicated region
    $region10: #{tpu_custom_call.1} parent=1 // pred_check
      _
    $region11: #{tpu_custom_call.1} parent=1 // pred_check_branch
      %38 = sbr.rel (0) target = $region13
    $region12: #{tpu_custom_call.1} parent=1 // pred_region
      %s40 = ssub.s32 128, 128
      %41 = vsyncadd [#allocation6], %s40
      %s43 = sshll.u32 [#allocation7], 4
      %s44 = int_to_ptr.vmem [resolvable:$true] %s43
      %46 = dma.hbm_to_vmem [thread:$0]  %s2, 128, %s44, [#allocation6]
    $region13: #{tpu_custom_call.1} parent=1 // pred_fallthru
      _
    // Predicated region
    $region14: #{tpu_custom_call.1} parent=1 // pred_check
      _
    $region15: #{tpu_custom_call.1} parent=1 // pred_check_branch
      %48 = sbr.rel (0) target = $region17
    $region16: #{tpu_custom_call.1} parent=1 // pred_region
      %s50 = ssub.s32 8192, 8192
      %51 = vsyncadd [#allocation9], %s50
      %s52 = sshll.u32 [#allocation8], 4
      %s53 = int_to_ptr.vmem [resolvable:$true] %s52
      %58 = dma.hbm_to_vmem [thread:$0]  %s3, 8192, %s53, [#allocation9], 256, 256, 16
    $region17: #{tpu_custom_call.1} parent=1 // pred_fallthru
      _
    // Predicated region
    $region18: #{tpu_custom_call.1} parent=1 // pred_check
      _
    $region19: #{tpu_custom_call.1} parent=1 // pred_check_branch
      %60 = sbr.rel (0) target = $region21
    $region20: #{tpu_custom_call.1} parent=1 // pred_region
      _
    $region21: #{tpu_custom_call.1} parent=1 // pred_fallthru
      _
    // Predicated region
    $region22: #{tpu_custom_call.1} parent=1 // pred_check
      _
    $region23: #{tpu_custom_call.1} parent=1 // pred_check_branch
      %62 = sbr.rel (0) target = $region25
    $region24: #{tpu_custom_call.1} parent=1 // pred_region
      %63 = dma.done [#allocation3], 128
    $region25: #{tpu_custom_call.1} parent=1 // pred_fallthru
      _
    // Predicated region
    $region26: #{tpu_custom_call.1} parent=1 // pred_check
      _
    $region27: #{tpu_custom_call.1} parent=1 // pred_check_branch
      %65 = sbr.rel (0) target = $region29
    $region28: #{tpu_custom_call.1} parent=1 // pred_region
      %66 = dma.done [#allocation6], 128
    $region29: #{tpu_custom_call.1} parent=1 // pred_fallthru
      _
    // Predicated region
    $region30: #{tpu_custom_call.1} parent=1 // pred_check
      _
    $region31: #{tpu_custom_call.1} parent=1 // pred_check_branch
      %68 = sbr.rel (0) target = $region33
    $region32: #{tpu_custom_call.1} parent=1 // pred_region
      %69 = dma.done [#allocation6], 128
    $region33: #{tpu_custom_call.1} parent=1 // pred_fallthru
      _
    // Predicated region
    $region34: #{tpu_custom_call.1} parent=1 // pred_check
      _
    $region35: #{tpu_custom_call.1} parent=1 // pred_check_branch
      %71 = sbr.rel (0) target = $region37
    $region36: #{tpu_custom_call.1} parent=1 // pred_region
      %72 = dma.done [#allocation9], 8192
    $region37: #{tpu_custom_call.1} parent=1 // pred_fallthru
      _
    %v73 = vld [vmem:[#allocation2] sm:$0xff]
    %v74 = vld [vmem:[#allocation5] sm:$0xff]
    %v75 = vpack.c.bf16 %v73, %v73
    %v76 = vpack.c.bf16 %v74, %v74
    %v77 = vld [vmem:[#allocation8] sm:$0xff]
    %v78 = vld [vmem:[#allocation8 + $0x8] sm:$0xff]
    %v79 = vld [vmem:[#allocation8 + $0x10] sm:$0xff]
    %v80 = vld [vmem:[#allocation8 + $0x18] sm:$0xff]
    %v81 = vld [vmem:[#allocation8 + $0x20] sm:$0xff]
    %v82 = vld [vmem:[#allocation8 + $0x28] sm:$0xff]
    %v83 = vld [vmem:[#allocation8 + $0x30] sm:$0xff]
    %v84 = vld [vmem:[#allocation8 + $0x38] sm:$0xff]
    %v85 = vld [vmem:[#allocation8 + $0x40] sm:$0xff]
    %v86 = vld [vmem:[#allocation8 + $0x48] sm:$0xff]
    %v87 = vld [vmem:[#allocation8 + $0x50] sm:$0xff]
    %v88 = vld [vmem:[#allocation8 + $0x58] sm:$0xff]
    %v89 = vld [vmem:[#allocation8 + $0x60] sm:$0xff]
    %v90 = vld [vmem:[#allocation8 + $0x68] sm:$0xff]
    %v91 = vld [vmem:[#allocation8 + $0x70] sm:$0xff]
    %v92 = vld [vmem:[#allocation8 + $0x78] sm:$0xff]
    %v93 = vld [vmem:[#allocation8 + $0x80] sm:$0xff]
    %v94 = vld [vmem:[#allocation8 + $0x88] sm:$0xff]
    %v95 = vld [vmem:[#allocation8 + $0x90] sm:$0xff]
    %v96 = vld [vmem:[#allocation8 + $0x98] sm:$0xff]
    %v97 = vld [vmem:[#allocation8 + $0xa0] sm:$0xff]
    %v98 = vld [vmem:[#allocation8 + $0xa8] sm:$0xff]
    %v99 = vld [vmem:[#allocation8 + $0xb0] sm:$0xff]
    %v100 = vld [vmem:[#allocation8 + $0xb8] sm:$0xff]
    %v101 = vld [vmem:[#allocation8 + $0xc0] sm:$0xff]
    %v102 = vld [vmem:[#allocation8 + $0xc8] sm:$0xff]
    %v103 = vld [vmem:[#allocation8 + $0xd0] sm:$0xff]
    %v104 = vld [vmem:[#allocation8 + $0xd8] sm:$0xff]
    %v105 = vld [vmem:[#allocation8 + $0xe0] sm:$0xff]
    %v106 = vld [vmem:[#allocation8 + $0xe8] sm:$0xff]
    %v107 = vld [vmem:[#allocation8 + $0xf0] sm:$0xff]
    %v108 = vld [vmem:[#allocation8 + $0xf8] sm:$0xff]
    %v109 = vld [vmem:[#allocation8 + $0x100] sm:$0xff]
    %v110 = vld [vmem:[#allocation8 + $0x108] sm:$0xff]
    %v111 = vld [vmem:[#allocation8 + $0x110] sm:$0xff]
    %v112 = vld [vmem:[#allocation8 + $0x118] sm:$0xff]
    %v113 = vld [vmem:[#allocation8 + $0x120] sm:$0xff]
    %v114 = vld [vmem:[#allocation8 + $0x128] sm:$0xff]
    %v115 = vld [vmem:[#allocation8 + $0x130] sm:$0xff]
    %v116 = vld [vmem:[#allocation8 + $0x138] sm:$0xff]
    %v117 = vld [vmem:[#allocation8 + $0x140] sm:$0xff]
    %v118 = vld [vmem:[#allocation8 + $0x148] sm:$0xff]
    %v119 = vld [vmem:[#allocation8 + $0x150] sm:$0xff]
    %v120 = vld [vmem:[#allocation8 + $0x158] sm:$0xff]
    %v121 = vld [vmem:[#allocation8 + $0x160] sm:$0xff]
    %v122 = vld [vmem:[#allocation8 + $0x168] sm:$0xff]
    %v123 = vld [vmem:[#allocation8 + $0x170] sm:$0xff]
    %v124 = vld [vmem:[#allocation8 + $0x178] sm:$0xff]
    %v125 = vld [vmem:[#allocation8 + $0x180] sm:$0xff]
    %v126 = vld [vmem:[#allocation8 + $0x188] sm:$0xff]
    %v127 = vld [vmem:[#allocation8 + $0x190] sm:$0xff]
    %v128 = vld [vmem:[#allocation8 + $0x198] sm:$0xff]
    %v129 = vld [vmem:[#allocation8 + $0x1a0] sm:$0xff]
    %v130 = vld [vmem:[#allocation8 + $0x1a8] sm:$0xff]
    %v131 = vld [vmem:[#allocation8 + $0x1b0] sm:$0xff]
    %v132 = vld [vmem:[#allocation8 + $0x1b8] sm:$0xff]
    %v133 = vld [vmem:[#allocation8 + $0x1c0] sm:$0xff]
    %v134 = vld [vmem:[#allocation8 + $0x1c8] sm:$0xff]
    %v135 = vld [vmem:[#allocation8 + $0x1d0] sm:$0xff]
    %v136 = vld [vmem:[#allocation8 + $0x1d8] sm:$0xff]
    %v137 = vld [vmem:[#allocation8 + $0x1e0] sm:$0xff]
    %v138 = vld [vmem:[#allocation8 + $0x1e8] sm:$0xff]
    %v139 = vld [vmem:[#allocation8 + $0x1f0] sm:$0xff]
    %v140 = vld [vmem:[#allocation8 + $0x1f8] sm:$0xff]
    %v141 = vld [vmem:[%s4] sm:$0xf]
    %v143 = vlaneseq
    %v144 = vshrl.u32 %v143, 7
    %v145 = vsub.s32 0, %v144
    %v146 = vrot.slane %v141, %v145
    %v147 = vlaneseq
    %v148 = vshrl.u32 %v147, 7
    %v149 = vsub.s32 1, %v148
    %v150 = vrot.slane %v141, %v149
    %v151 = vlaneseq
    %v152 = vshrl.u32 %v151, 7
    %v153 = vsub.s32 2, %v152
    %v154 = vrot.slane %v141, %v153
    %v155 = vlaneseq
    %v156 = vshrl.u32 %v155, 7
    %v157 = vsub.s32 3, %v156
    %v158 = vrot.slane %v141, %v157
    %v227 = vunpack.c.l.b16 %v77
    %v228 = vunpack.c.h.b16 %v77
    %v229 = vunpack.c.l.b16 %v78
    %v230 = vunpack.c.h.b16 %v78
    %v231 = vunpack.c.l.b16 %v79
    %v232 = vunpack.c.h.b16 %v79
    %v233 = vunpack.c.l.b16 %v80
    %v234 = vunpack.c.h.b16 %v80
    %v235 = vunpack.c.l.b16 %v81
    %v236 = vunpack.c.h.b16 %v81
    %v237 = vunpack.c.l.b16 %v82
    %v238 = vunpack.c.h.b16 %v82
    %v239 = vunpack.c.l.b16 %v83
    %v240 = vunpack.c.h.b16 %v83
    %v241 = vunpack.c.l.b16 %v84
    %v242 = vunpack.c.h.b16 %v84
    %v243 = vunpack.c.l.b16 %v85
    %v244 = vunpack.c.h.b16 %v85
    %v245 = vunpack.c.l.b16 %v86
    %v246 = vunpack.c.h.b16 %v86
    %v247 = vunpack.c.l.b16 %v87
    %v248 = vunpack.c.h.b16 %v87
    %v249 = vunpack.c.l.b16 %v88
    %v250 = vunpack.c.h.b16 %v88
    %v251 = vunpack.c.l.b16 %v89
    %v252 = vunpack.c.h.b16 %v89
    %v253 = vunpack.c.l.b16 %v90
    %v254 = vunpack.c.h.b16 %v90
    %v255 = vunpack.c.l.b16 %v91
    %v256 = vunpack.c.h.b16 %v91
    %v257 = vunpack.c.l.b16 %v92
    %v258 = vunpack.c.h.b16 %v92
    %v259 = vunpack.c.l.b16 %v93
    %v260 = vunpack.c.h.b16 %v93
    %v261 = vunpack.c.l.b16 %v94
    %v262 = vunpack.c.h.b16 %v94
    %v263 = vunpack.c.l.b16 %v95
    %v264 = vunpack.c.h.b16 %v95
    %v265 = vunpack.c.l.b16 %v96
    %v266 = vunpack.c.h.b16 %v96
    %v267 = vunpack.c.l.b16 %v97
    %v268 = vunpack.c.h.b16 %v97
    %v269 = vunpack.c.l.b16 %v98
    %v270 = vunpack.c.h.b16 %v98
    %v271 = vunpack.c.l.b16 %v99
    %v272 = vunpack.c.h.b16 %v99
    %v273 = vunpack.c.l.b16 %v100
    %v274 = vunpack.c.h.b16 %v100
    %v275 = vunpack.c.l.b16 %v101
    %v276 = vunpack.c.h.b16 %v101
    %v277 = vunpack.c.l.b16 %v102
    %v278 = vunpack.c.h.b16 %v102
    %v279 = vunpack.c.l.b16 %v103
    %v280 = vunpack.c.h.b16 %v103
    %v281 = vunpack.c.l.b16 %v104
    %v282 = vunpack.c.h.b16 %v104
    %v283 = vunpack.c.l.b16 %v105
    %v284 = vunpack.c.h.b16 %v105
    %v285 = vunpack.c.l.b16 %v106
    %v286 = vunpack.c.h.b16 %v106
    %v287 = vunpack.c.l.b16 %v107
    %v288 = vunpack.c.h.b16 %v107
    %v289 = vunpack.c.l.b16 %v108
    %v290 = vunpack.c.h.b16 %v108
    %v291 = vunpack.c.l.b16 %v109
    %v292 = vunpack.c.h.b16 %v109
    %v293 = vunpack.c.l.b16 %v110
    %v294 = vunpack.c.h.b16 %v110
    %v295 = vunpack.c.l.b16 %v111
    %v296 = vunpack.c.h.b16 %v111
    %v297 = vunpack.c.l.b16 %v112
    %v298 = vunpack.c.h.b16 %v112
    %v299 = vunpack.c.l.b16 %v113
    %v300 = vunpack.c.h.b16 %v113
    %v301 = vunpack.c.l.b16 %v114
    %v302 = vunpack.c.h.b16 %v114
    %v303 = vunpack.c.l.b16 %v115
    %v304 = vunpack.c.h.b16 %v115
    %v305 = vunpack.c.l.b16 %v116
    %v306 = vunpack.c.h.b16 %v116
    %v307 = vunpack.c.l.b16 %v117
    %v308 = vunpack.c.h.b16 %v117
    %v309 = vunpack.c.l.b16 %v118
    %v310 = vunpack.c.h.b16 %v118
    %v311 = vunpack.c.l.b16 %v119
    %v312 = vunpack.c.h.b16 %v119
    %v313 = vunpack.c.l.b16 %v120
    %v314 = vunpack.c.h.b16 %v120
    %v315 = vunpack.c.l.b16 %v121
    %v316 = vunpack.c.h.b16 %v121
    %v317 = vunpack.c.l.b16 %v122
    %v318 = vunpack.c.h.b16 %v122
    %v319 = vunpack.c.l.b16 %v123
    %v320 = vunpack.c.h.b16 %v123
    %v321 = vunpack.c.l.b16 %v124
    %v322 = vunpack.c.h.b16 %v124
    %v323 = vunpack.c.l.b16 %v125
    %v324 = vunpack.c.h.b16 %v125
    %v325 = vunpack.c.l.b16 %v126
    %v326 = vunpack.c.h.b16 %v126
    %v327 = vunpack.c.l.b16 %v127
    %v328 = vunpack.c.h.b16 %v127
    %v329 = vunpack.c.l.b16 %v128
    %v330 = vunpack.c.h.b16 %v128
    %v331 = vunpack.c.l.b16 %v129
    %v332 = vunpack.c.h.b16 %v129
    %v333 = vunpack.c.l.b16 %v130
    %v334 = vunpack.c.h.b16 %v130
    %v335 = vunpack.c.l.b16 %v131
    %v336 = vunpack.c.h.b16 %v131
    %v337 = vunpack.c.l.b16 %v132
    %v338 = vunpack.c.h.b16 %v132
    %v339 = vunpack.c.l.b16 %v133
    %v340 = vunpack.c.h.b16 %v133
    %v341 = vunpack.c.l.b16 %v134
    %v342 = vunpack.c.h.b16 %v134
    %v343 = vunpack.c.l.b16 %v135
    %v344 = vunpack.c.h.b16 %v135
    %v345 = vunpack.c.l.b16 %v136
    %v346 = vunpack.c.h.b16 %v136
    %v347 = vunpack.c.l.b16 %v137
    %v348 = vunpack.c.h.b16 %v137
    %v349 = vunpack.c.l.b16 %v138
    %v350 = vunpack.c.h.b16 %v138
    %v351 = vunpack.c.l.b16 %v139
    %v352 = vunpack.c.h.b16 %v139
    %v353 = vunpack.c.l.b16 %v140
    %v354 = vunpack.c.h.b16 %v140
    %v355 = vpack.c.b16 %v231, %v227
    %v356 = vpack.c.b16 %v232, %v228
    %v357 = vpack.c.b16 %v233, %v229
    %v358 = vpack.c.b16 %v234, %v230
    %v359 = vpack.c.b16 %v239, %v235
    %v360 = vpack.c.b16 %v240, %v236
    %v361 = vpack.c.b16 %v241, %v237
    %v362 = vpack.c.b16 %v242, %v238
    %v363 = vpack.c.b16 %v247, %v243
    %v364 = vpack.c.b16 %v248, %v244
    %v365 = vpack.c.b16 %v249, %v245
    %v366 = vpack.c.b16 %v250, %v246
    %v367 = vpack.c.b16 %v255, %v251
    %v368 = vpack.c.b16 %v256, %v252
    %v369 = vpack.c.b16 %v257, %v253
    %v370 = vpack.c.b16 %v258, %v254
    %v371 = vpack.c.b16 %v263, %v259
    %v372 = vpack.c.b16 %v264, %v260
    %v373 = vpack.c.b16 %v265, %v261
    %v374 = vpack.c.b16 %v266, %v262
    %v375 = vpack.c.b16 %v271, %v267
    %v376 = vpack.c.b16 %v272, %v268
    %v377 = vpack.c.b16 %v273, %v269
    %v378 = vpack.c.b16 %v274, %v270
    %v379 = vpack.c.b16 %v279, %v275
    %v380 = vpack.c.b16 %v280, %v276
    %v381 = vpack.c.b16 %v281, %v277
    %v382 = vpack.c.b16 %v282, %v278
    %v383 = vpack.c.b16 %v287, %v283
    %v384 = vpack.c.b16 %v288, %v284
    %v385 = vpack.c.b16 %v289, %v285
    %v386 = vpack.c.b16 %v290, %v286
    %v387 = vpack.c.b16 %v295, %v291
    %v388 = vpack.c.b16 %v296, %v292
    %v389 = vpack.c.b16 %v297, %v293
    %v390 = vpack.c.b16 %v298, %v294
    %v391 = vpack.c.b16 %v303, %v299
    %v392 = vpack.c.b16 %v304, %v300
    %v393 = vpack.c.b16 %v305, %v301
    %v394 = vpack.c.b16 %v306, %v302
    %v395 = vpack.c.b16 %v311, %v307
    %v396 = vpack.c.b16 %v312, %v308
    %v397 = vpack.c.b16 %v313, %v309
    %v398 = vpack.c.b16 %v314, %v310
    %v399 = vpack.c.b16 %v319, %v315
    %v400 = vpack.c.b16 %v320, %v316
    %v401 = vpack.c.b16 %v321, %v317
    %v402 = vpack.c.b16 %v322, %v318
    %v403 = vpack.c.b16 %v327, %v323
    %v404 = vpack.c.b16 %v328, %v324
    %v405 = vpack.c.b16 %v329, %v325
    %v406 = vpack.c.b16 %v330, %v326
    %v407 = vpack.c.b16 %v335, %v331
    %v408 = vpack.c.b16 %v336, %v332
    %v409 = vpack.c.b16 %v337, %v333
    %v410 = vpack.c.b16 %v338, %v334
    %v411 = vpack.c.b16 %v343, %v339
    %v412 = vpack.c.b16 %v344, %v340
    %v413 = vpack.c.b16 %v345, %v341
    %v414 = vpack.c.b16 %v346, %v342
    %v415 = vpack.c.b16 %v351, %v347
    %v416 = vpack.c.b16 %v352, %v348
    %v417 = vpack.c.b16 %v353, %v349
    %v418 = vpack.c.b16 %v354, %v350
    %483 = vmatprep.subr.bf16.mxu0 %v356
    %484 = vmatpush1.bf16.msra.mxu0 %v355
    %485 = vmatprep.subr.bf16.mxu0 %v360
    %486 = vmatpush1.bf16.msra.mxu0 %v359
    %487 = vmatprep.subr.bf16.mxu0 %v364
    %488 = vmatpush1.bf16.msra.mxu0 %v363
    %489 = vmatprep.subr.bf16.mxu0 %v368
    %490 = vmatpush1.bf16.msra.mxu0 %v367
    %491 = vmatprep.subr.bf16.mxu0 %v372
    %492 = vmatpush1.bf16.msra.mxu0 %v371
    %493 = vmatprep.subr.bf16.mxu0 %v376
    %494 = vmatpush1.bf16.msra.mxu0 %v375
    %495 = vmatprep.subr.bf16.mxu0 %v380
    %496 = vmatpush1.bf16.msra.mxu0 %v379
    %497 = vmatprep.subr.bf16.mxu0 %v384
    %498 = vmatpush1.bf16.msra.mxu0 %v383
    %499 = vmatprep.subr.bf16.mxu0 %v388
    %500 = vmatpush1.bf16.msra.mxu0 %v387
    %501 = vmatprep.subr.bf16.mxu0 %v392
    %502 = vmatpush1.bf16.msra.mxu0 %v391
    %503 = vmatprep.subr.bf16.mxu0 %v396
    %504 = vmatpush1.bf16.msra.mxu0 %v395
    %505 = vmatprep.subr.bf16.mxu0 %v400
    %506 = vmatpush1.bf16.msra.mxu0 %v399
    %507 = vmatprep.subr.bf16.mxu0 %v404
    %508 = vmatpush1.bf16.msra.mxu0 %v403
    %509 = vmatprep.subr.bf16.mxu0 %v408
    %510 = vmatpush1.bf16.msra.mxu0 %v407
    %511 = vmatprep.subr.bf16.mxu0 %v412
    %512 = vmatpush1.bf16.msra.mxu0 %v411
    %513 = vmatprep.subr.bf16.mxu0 %v416
    %514 = vmatpush1.bf16.msra.mxu0 %v415
    %515 = vmatprep.mubr.bf16.mxu0 %v76
    %516 = vmatmul.mubr.bf16.gmra.mrb[0].mxu0 %v75
    %v517 = vpop.f32.mrb[0].mxu0
    %v518 = vadd.f32 %v146, %v517
    %v519 = vpop.f32.mrb[0].mxu0
    %v520 = vadd.f32 %v150, %v519
    %v521 = vpop.f32.mrb[0].mxu0
    %v522 = vpop.f32.mrb[0].mxu0
    %523 = vdwg.mxu0
    %524 = vmatprep.subr.bf16.mxu0 %v358
    %525 = vmatpush1.bf16.msra.mxu0 %v357
    %526 = vmatprep.subr.bf16.mxu0 %v362
    %527 = vmatpush1.bf16.msra.mxu0 %v361
    %528 = vmatprep.subr.bf16.mxu0 %v366
    %529 = vmatpush1.bf16.msra.mxu0 %v365
    %530 = vmatprep.subr.bf16.mxu0 %v370
    %531 = vmatpush1.bf16.msra.mxu0 %v369
    %532 = vmatprep.subr.bf16.mxu0 %v374
    %533 = vmatpush1.bf16.msra.mxu0 %v373
    %534 = vmatprep.subr.bf16.mxu0 %v378
    %535 = vmatpush1.bf16.msra.mxu0 %v377
    %536 = vmatprep.subr.bf16.mxu0 %v382
    %537 = vmatpush1.bf16.msra.mxu0 %v381
    %538 = vmatprep.subr.bf16.mxu0 %v386
    %539 = vmatpush1.bf16.msra.mxu0 %v385
    %540 = vmatprep.subr.bf16.mxu0 %v390
    %541 = vmatpush1.bf16.msra.mxu0 %v389
    %542 = vmatprep.subr.bf16.mxu0 %v394
    %543 = vmatpush1.bf16.msra.mxu0 %v393
    %544 = vmatprep.subr.bf16.mxu0 %v398
    %545 = vmatpush1.bf16.msra.mxu0 %v397
    %546 = vmatprep.subr.bf16.mxu0 %v402
    %547 = vmatpush1.bf16.msra.mxu0 %v401
    %548 = vmatprep.subr.bf16.mxu0 %v406
    %549 = vmatpush1.bf16.msra.mxu0 %v405
    %550 = vmatprep.subr.bf16.mxu0 %v410
    %551 = vmatpush1.bf16.msra.mxu0 %v409
    %552 = vmatprep.subr.bf16.mxu0 %v414
    %553 = vmatpush1.bf16.msra.mxu0 %v413
    %554 = vmatprep.subr.bf16.mxu0 %v418
    %555 = vmatpush1.bf16.msra.mxu0 %v417
    %556 = vmatprep.mubr.bf16.mxu0 %v76
    %557 = vmatmul.mubr.bf16.gmra.mrb[0].mxu0 %v75
    %v558 = vpop.f32.mrb[0].mxu0
    %v559 = vadd.f32 %v154, %v558
    %v560 = vpop.f32.mrb[0].mxu0
    %v561 = vadd.f32 %v158, %v560
    %v562 = vpop.f32.mrb[0].mxu0
    %v563 = vpop.f32.mrb[0].mxu0
    %564 = vdwg.mxu0
    %v565 = vxor.u32 %v518, 2147483648
    %v566 = vxor.u32 %v520, 2147483648
    %v567 = vxor.u32 %v559, 2147483648
    %v568 = vmul.f32 %v565, 1.442695
    %v569 = vpow.pop %v568
    %v570 = vmul.f32 %v566, 1.442695
    %v571 = vpow.pop %v570
    %v572 = vmul.f32 %v567, 1.442695
    %v573 = vpow.pop %v572
    %v574 = vadd.f32 %v569, 1.0
    %v575 = vadd.f32 %v571, 1.0
    %v576 = vadd.f32 %v573, 1.0
    %v577 = vrcp.pop %v574
    %v578 = vmul.f32 1.0, %v577
    %v579 = vrcp.pop %v575
    %v580 = vmul.f32 1.0, %v579
    %v581 = vrcp.pop %v576
    %v582 = vmul.f32 1.0, %v581
    %v583 = vtanh.pop %v561
    %v584 = vld [vmem:[#allocation7] sm:$0xff]
    %v585 = vmul.f32 %v580, %v584
    %v586 = vmul.f32 %v578, %v583
    %v587 = vadd.f32 %v585, %v586
    %v588 = vtanh.pop %v587
    %v589 = vmul.f32 %v582, %v588
    %590 = vst [vmem:[#allocation10] sm:$0xff] %v589
    %591 = vst [vmem:[#allocation11] sm:$0xff] %v587
    // Predicated region
    $region38: #{tpu_custom_call.1} parent=1 // pred_check
      _
    $region39: #{tpu_custom_call.1} parent=1 // pred_check_branch
      %593 = sbr.rel (0) target = $region41
    $region40: #{tpu_custom_call.1} parent=1 // pred_region
      %s595 = ssub.s32 128, 128
      %596 = vsyncadd [#allocation4], %s595
      %s598 = sshll.u32 [#allocation10], 4
      %s599 = int_to_ptr.vmem [resolvable:$true] %s598
      %601 = dma.vmem_to_hbm [thread:$0]  %s599, 128, %s5, [#allocation4]
    $region41: #{tpu_custom_call.1} parent=1 // pred_fallthru
      _
    // Predicated region
    $region42: #{tpu_custom_call.1} parent=1 // pred_check
      _
    $region43: #{tpu_custom_call.1} parent=1 // pred_check_branch
      %603 = sbr.rel (0) target = $region45
    $region44: #{tpu_custom_call.1} parent=1 // pred_region
      %s605 = ssub.s32 128, 128
      %606 = vsyncadd [#allocation12], %s605
      %s608 = sshll.u32 [#allocation11], 4
      %s609 = int_to_ptr.vmem [resolvable:$true] %s608
      %611 = dma.vmem_to_hbm [thread:$0]  %s609, 128, %s6, [#allocation12]
    $region45: #{tpu_custom_call.1} parent=1 // pred_fallthru
      _
    // Predicated region
    $region46: #{tpu_custom_call.1} parent=1 // pred_check
      _
    $region47: #{tpu_custom_call.1} parent=1 // pred_check_branch
      %613 = sbr.rel (0) target = $region49
    $region48: #{tpu_custom_call.1} parent=1 // pred_region
      %614 = dma.done [#allocation4], 128
    $region49: #{tpu_custom_call.1} parent=1 // pred_fallthru
      _
    // Predicated region
    $region50: #{tpu_custom_call.1} parent=1 // pred_check
      _
    $region51: #{tpu_custom_call.1} parent=1 // pred_check_branch
      %616 = sbr.rel (0) target = $region53
    $region52: #{tpu_custom_call.1} parent=1 // pred_region
      %617 = dma.done [#allocation12], 128
    $region53: #{tpu_custom_call.1} parent=1 // pred_fallthru
      _
    %618 = vsyncpa [#allocation3], 1
    %619 = vsyncpa [#allocation6], 1
    %620 = vsyncpa [#allocation9], 1
    %621 = vsyncpa [#allocation4], 1
    %622 = vsyncpa [#allocation12], 1

</llo_original>
